<compile_context>
chip_gen: v5e
topology: v5e:2x2
jax: 0.10.0
libtpu: 0.0.40
codegen_flags: <defaults>
</compile_context>

<pallas_src>
import functools

import jax
import jax.numpy as jnp
from jax.experimental import pallas as pl
from jax.experimental.pallas import tpu as pltpu

IGNORE_INDEX = -1


def _ce2d_kernel(logits_ref, targets_ref, out_sum_ref, out_cnt_ref,
                 sum_acc, cnt_acc, *, ignore_index):
    t_idx = pl.program_id(2)

    @pl.when(t_idx == 0)
    def _init():
        sum_acc[...] = jnp.zeros_like(sum_acc)
        cnt_acc[...] = jnp.zeros_like(cnt_acc)

    x = logits_ref[0].astype(jnp.float32)     # (C, tile_rows, 128), channels major
    tgt = targets_ref[0]                      # (tile_rows, 128) int32

    # Numerically stable log-sum-exp over channels (major dim -> VPU/EUP only).
    m = jnp.max(x, axis=0)                                       # (tile_rows, 128)
    lse = m + jnp.log(jnp.sum(jnp.exp(x - m[None]), axis=0))     # (tile_rows, 128)

    # x[target] per pixel via one-hot select + channel sum.
    # (targets >= C silently give picked = 0; labels assumed pre-validated.)
    ch = jax.lax.broadcasted_iota(jnp.int32, x.shape, 0)
    picked = jnp.sum(jnp.where(ch == tgt[None], x, 0.0), axis=0)

    # `valid` also masks padded / stale rows (their targets were padded with
    # ignore_index in the wrapper), so no extra bounds mask is ever needed.
    valid = tgt != ignore_index
    sum_acc[...] += jnp.where(valid, lse - picked, 0.0)
    cnt_acc[...] += valid.astype(jnp.int32)

    @pl.when(t_idx == pl.num_programs(2) - 1)
    def _finalize():
        out_sum_ref[...] = jnp.full((1, 1, 1, 128), jnp.sum(sum_acc[...]),
                                    dtype=jnp.float32)
        out_cnt_ref[...] = jnp.full((1, 1, 1, 128), jnp.sum(cnt_acc[...]),
                                    dtype=jnp.int32)


def cross_entropy_loss_2d(inputs, targets, ignore_index=IGNORE_INDEX,
                          target_block_f32_bytes=4 * 1024 * 1024):
    """Mean cross-entropy over non-ignored pixels (CrossEntropyLoss2d.forward).

    inputs:  [N, C, H, W] logits (f32 or bf16; upcast to f32 inside the kernel)
    targets: [N, H, W] integer class ids; `ignore_index` marks ignored pixels
    """
    # TODO(synk): per-class `weight` vector (module constructor arg) not
    # implemented; this matches the module's default weight=None.
    n, c, h, w = inputs.shape
    assert targets.shape == (n, h, w), "target shape mismatch"
    hw = h * w

    # --- pixel axis -> (rows, 128) lanes -------------------------------------
    logits_flat = inputs.reshape(n, c, hw)
    if hw % 128 != 0:
        # TODO(synk): rare path (HW not a multiple of 128) pays one HBM copy.
        logits_flat = jnp.pad(logits_flat,
                              ((0, 0), (0, 0), (0, 128 - hw % 128)))
    hw_pad = logits_flat.shape[-1]
    r = hw_pad // 128
    logits4 = logits_flat.reshape(n, c, r, 128)        # free (row-major) reshape

    # --- C/dtype-aware tile size: ~4 MiB of f32 working set per block --------
    rows_for_budget = target_block_f32_bytes // (c * 128 * 4)
    if rows_for_budget >= r or r <= 8:
        tile_rows = r                                  # full dim (any size legal)
    else:
        tile_rows = max(8, min((rows_for_budget // 8) * 8, (r // 8) * 8))
    t_total = pl.cdiv(r, tile_rows)

    # Parallel pixel partition: both v7x TensorCores get work even when N == 1.
    p_parts = 2 if (t_total >= 2 and t_total % 2 == 0) else 1
    t_per_p = t_total // p_parts

    # --- targets: pad with ignore_index up to the tile grid (cheap, int32) ---
    tgt_flat = targets.astype(jnp.int32).reshape(n, hw)
    tgt_rows = t_total * tile_rows
    pad_px = tgt_rows * 128 - hw
    if pad_px:
        tgt_flat = jnp.pad(tgt_flat, ((0, 0), (0, pad_px)),
                           constant_values=ignore_index)
    tgt3 = tgt_flat.reshape(n, tgt_rows, 128)

    kernel = functools.partial(_ce2d_kernel, ignore_index=ignore_index)

    out_sum, out_cnt = pl.pallas_call(
        kernel,
        out_shape=(jax.ShapeDtypeStruct((n, p_parts, 1, 128), jnp.float32),
                   jax.ShapeDtypeStruct((n, p_parts, 1, 128), jnp.int32)),
        grid_spec=pltpu.PrefetchScalarGridSpec(
            num_scalar_prefetch=0,
            grid=(n, p_parts, t_per_p),
            in_specs=[
                pl.BlockSpec((1, c, tile_rows, 128),
                             lambda i, p, t: (i, 0, p * t_per_p + t, 0)),
                pl.BlockSpec((1, tile_rows, 128),
                             lambda i, p, t: (i, p * t_per_p + t, 0)),
            ],
            out_specs=[
                pl.BlockSpec((1, 1, 1, 128), lambda i, p, t: (i, p, 0, 0)),
                pl.BlockSpec((1, 1, 1, 128), lambda i, p, t: (i, p, 0, 0)),
            ],
            scratch_shapes=[
                pltpu.VMEM((tile_rows, 128), jnp.float32),  # per-pixel loss acc
                pltpu.VMEM((tile_rows, 128), jnp.int32),    # per-pixel valid acc
            ],
        ),
        compiler_params=pltpu.CompilerParams(
            dimension_semantics=("parallel", "parallel", "arbitrary"),
            # ~4 MiB blocks + f32 temps stay well under this; 48 MiB is below
            # v7x's 64 MiB physical VMEM and fine on v5e/v6e.
            vmem_limit_bytes=48 * 1024 * 1024,
        ),
    )(logits4, tgt3)

    total = jnp.sum(out_sum[:, :, 0, 0])
    count = jnp.sum(out_cnt[:, :, 0, 0])            # exact int32 count
    return total / count.astype(jnp.float32)


def _reference(inputs, targets, ignore_index=IGNORE_INDEX):
    logp = jax.nn.log_softmax(inputs.astype(jnp.float32), axis=1)  # (N,C,H,W)
    t = targets.astype(jnp.int32)
    valid = t != ignore_index
    t_safe = jnp.where(valid, t, 0)
    picked = jnp.take_along_axis(logp, t_safe[:, None, :, :], axis=1)[:, 0]
    loss = jnp.where(valid, -picked, 0.0)
    return jnp.sum(loss) / jnp.sum(valid).astype(jnp.float32)


if __name__ == "__main__":
    key = jax.random.PRNGKey(0)
    k1, k2, k3 = jax.random.split(key, 3)

    N, C, H, W = 2, 4, 16, 16
    logits = jax.random.normal(k1, (N, C, H, W), jnp.float32)
    classes = jax.random.randint(k2, (N, H, W), 0, C)
    ignore_mask = jax.random.uniform(k3, (N, H, W)) < 0.1
    targets = jnp.where(ignore_mask, IGNORE_INDEX, classes).astype(jnp.int32)

    out = cross_entropy_loss_2d(logits, targets)
    out = jax.block_until_ready(out)

    ref = _reference(logits, targets)
    assert jnp.allclose(out, ref, atol=1e-5, rtol=1e-5), (out, ref)

    print("KERNEL_OK")
</pallas_src>

<mosaic_0001>
module attributes {stable_mosaic.version = 11 : i64} {
  func.func @_ce2d_kernel(%arg0: i32, %arg1: i32, %arg2: i32, %arg3: memref<1x4x2x128xf32, #tpu.memory_space<vmem>>, %arg4: memref<1x2x128xi32, #tpu.memory_space<vmem>>, %arg5: memref<1x1x1x128xf32, #tpu.memory_space<vmem>>, %arg6: memref<1x1x1x128xi32, #tpu.memory_space<vmem>>, %arg7: memref<2x128xf32, #tpu.memory_space<vmem>>, %arg8: memref<2x128xi32, #tpu.memory_space<vmem>>) attributes {dimension_semantics = [#tpu.dimension_semantics<parallel>, #tpu.dimension_semantics<parallel>, #tpu.dimension_semantics<arbitrary>], iteration_bounds = array<i64: 2, 1, 1>, scalar_prefetch = 0 : i64, scratch_operands = 2 : i64, tpu.core_type = #tpu.core_type<tc>, window_params = [{transform_indices = @transform_0, window_bounds = array<i64: 1, 4, 2, 128>}, {transform_indices = @transform_1, window_bounds = array<i64: 1, 2, 128>}, {transform_indices = @transform_2, window_bounds = array<i64: 1, 1, 1, 128>}, {transform_indices = @transform_3, window_bounds = array<i64: 1, 1, 1, 128>}]} {
    %c0_i32 = arith.constant 0 : i32
    %0 = arith.cmpi eq, %arg2, %c0_i32 : i32
    %1 = arith.extui %0 : i1 to i32
    %c0_i32_0 = arith.constant 0 : i32
    %2 = arith.cmpi ne, %1, %c0_i32_0 : i32
    scf.if %2 {
      %cst_21 = arith.constant 0.000000e+00 : f32
      %37 = vector.broadcast %cst_21 : f32 to vector<2x128xf32>
      %c0_22 = arith.constant 0 : index
      %c0_23 = arith.constant 0 : index
      %38 = vector.load %arg7[%c0_22, %c0_23] : memref<2x128xf32, #tpu.memory_space<vmem>>, vector<2x128xf32>
      tpu.vector_store %arg7[%c0_22, %c0_23], %37 {strides = array<i32>} : memref<2x128xf32, #tpu.memory_space<vmem>>, vector<2x128xf32>,
      %c0_i32_24 = arith.constant 0 : i32
      %39 = vector.broadcast %c0_i32_24 : i32 to vector<2x128xi32>
      %c0_25 = arith.constant 0 : index
      %c0_26 = arith.constant 0 : index
      %40 = vector.load %arg8[%c0_25, %c0_26] : memref<2x128xi32, #tpu.memory_space<vmem>>, vector<2x128xi32>
      tpu.vector_store %arg8[%c0_25, %c0_26], %39 {strides = array<i32>} : memref<2x128xi32, #tpu.memory_space<vmem>>, vector<2x128xi32>,
    } else {
    }
    %c0 = arith.constant 0 : index
    %c0_1 = arith.constant 0 : index
    %c0_2 = arith.constant 0 : index
    %c0_3 = arith.constant 0 : index
    %3 = vector.load %arg3[%c0, %c0_1, %c0_2, %c0_3] : memref<1x4x2x128xf32, #tpu.memory_space<vmem>>, vector<1x4x2x128xf32>
    %4 = vector.shape_cast %3 : vector<1x4x2x128xf32> to vector<4x2x128xf32>
    %c0_4 = arith.constant 0 : index
    %c0_5 = arith.constant 0 : index
    %c0_6 = arith.constant 0 : index
    %5 = vector.load %arg4[%c0_4, %c0_5, %c0_6] : memref<1x2x128xi32, #tpu.memory_space<vmem>>, vector<1x2x128xi32>
    %6 = vector.shape_cast %5 : vector<1x2x128xi32> to vector<2x128xi32>
    %cst = arith.constant dense<0xFF800000> : vector<2x128xf32>
    %7 = vector.multi_reduction <maximumf>, %4, %cst [0] : vector<4x2x128xf32> to vector<2x128xf32>
    %8 = vector.shape_cast %7 : vector<2x128xf32> to vector<1x2x128xf32>
    %9 = vector.broadcast %8 : vector<1x2x128xf32> to vector<4x2x128xf32>
    %10 = arith.subf %4, %9 : vector<4x2x128xf32>
    %11 = math.exp %10 : vector<4x2x128xf32>
    %cst_7 = arith.constant dense<0.000000e+00> : vector<2x128xf32>
    %12 = vector.multi_reduction <add>, %11, %cst_7 [0] : vector<4x2x128xf32> to vector<2x128xf32>
    %13 = math.log %12 : vector<2x128xf32>
    %14 = arith.addf %7, %13 : vector<2x128xf32>
    %15 = tpu.iota {dimensions = array<i32: 0>} : vector<4x2x128xi32>
    %16 = vector.shape_cast %6 : vector<2x128xi32> to vector<1x2x128xi32>
    %17 = vector.broadcast %16 : vector<1x2x128xi32> to vector<4x2x128xi32>
    %18 = arith.cmpi eq, %15, %17 : vector<4x2x128xi32>
    %cst_8 = arith.constant 0.000000e+00 : f32
    %19 = vector.broadcast %cst_8 : f32 to vector<4x2x128xf32>
    %20 = arith.select %18, %4, %19 : vector<4x2x128xi1>, vector<4x2x128xf32>
    %cst_9 = arith.constant dense<0.000000e+00> : vector<2x128xf32>
    %21 = vector.multi_reduction <add>, %20, %cst_9 [0] : vector<4x2x128xf32> to vector<2x128xf32>
    %c-1_i32 = arith.constant -1 : i32
    %22 = vector.broadcast %c-1_i32 : i32 to vector<2x128xi32>
    %23 = arith.cmpi ne, %6, %22 : vector<2x128xi32>
    %c0_10 = arith.constant 0 : index
    %c0_11 = arith.constant 0 : index
    %24 = vector.load %arg7[%c0_10, %c0_11] : memref<2x128xf32, #tpu.memory_space<vmem>>, vector<2x128xf32>
    %25 = arith.subf %14, %21 : vector<2x128xf32>
    %cst_12 = arith.constant 0.000000e+00 : f32
    %26 = vector.broadcast %cst_12 : f32 to vector<2x128xf32>
    %27 = arith.select %23, %25, %26 : vector<2x128xi1>, vector<2x128xf32>
    %28 = arith.addf %24, %27 : vector<2x128xf32>
    %c0_13 = arith.constant 0 : index
    %c0_14 = arith.constant 0 : index
    %29 = vector.load %arg7[%c0_13, %c0_14] : memref<2x128xf32, #tpu.memory_space<vmem>>, vector<2x128xf32>
    tpu.vector_store %arg7[%c0_13, %c0_14], %28 {strides = array<i32>} : memref<2x128xf32, #tpu.memory_space<vmem>>, vector<2x128xf32>,
    %c0_15 = arith.constant 0 : index
    %c0_16 = arith.constant 0 : index
    %30 = vector.load %arg8[%c0_15, %c0_16] : memref<2x128xi32, #tpu.memory_space<vmem>>, vector<2x128xi32>
    %31 = arith.extui %23 : vector<2x128xi1> to vector<2x128xi32>
    %32 = arith.addi %30, %31 : vector<2x128xi32>
    %c0_17 = arith.constant 0 : index
    %c0_18 = arith.constant 0 : index
    %33 = vector.load %arg8[%c0_17, %c0_18] : memref<2x128xi32, #tpu.memory_space<vmem>>, vector<2x128xi32>
    tpu.vector_store %arg8[%c0_17, %c0_18], %32 {strides = array<i32>} : memref<2x128xi32, #tpu.memory_space<vmem>>, vector<2x128xi32>,
    %c0_i32_19 = arith.constant 0 : i32
    %34 = arith.cmpi eq, %arg2, %c0_i32_19 : i32
    %35 = arith.extui %34 : i1 to i32
    %c0_i32_20 = arith.constant 0 : i32
    %36 = arith.cmpi ne, %35, %c0_i32_20 : i32
    scf.if %36 {
      %c0_21 = arith.constant 0 : index
      %c0_22 = arith.constant 0 : index
      %37 = vector.load %arg7[%c0_21, %c0_22] : memref<2x128xf32, #tpu.memory_space<vmem>>, vector<2x128xf32>
      %38 = vector.shape_cast %37 : vector<2x128xf32> to vector<1x2x128xf32>
      %cst_23 = arith.constant dense<0.000000e+00> : vector<1xf32>
      %39 = vector.multi_reduction <add>, %38, %cst_23 [1, 2] : vector<1x2x128xf32> to vector<1xf32>
      %40 = vector.shape_cast %39 : vector<1xf32> to vector<1x1x1xf32>
      %41 = vector.extract %40[0, 0, 0] : f32 from vector<1x1x1xf32>
      %42 = vector.broadcast %41 : f32 to vector<1x1x1x128xf32>
      %c0_24 = arith.constant 0 : index
      %c0_25 = arith.constant 0 : index
      %c0_26 = arith.constant 0 : index
      %c0_27 = arith.constant 0 : index
      %43 = vector.load %arg5[%c0_24, %c0_25, %c0_26, %c0_27] : memref<1x1x1x128xf32, #tpu.memory_space<vmem>>, vector<1x1x1x128xf32>
      tpu.vector_store %arg5[%c0_24, %c0_25, %c0_26, %c0_27], %42 {strides = array<i32>} : memref<1x1x1x128xf32, #tpu.memory_space<vmem>>, vector<1x1x1x128xf32>,
      %c0_28 = arith.constant 0 : index
      %c0_29 = arith.constant 0 : index
      %44 = vector.load %arg8[%c0_28, %c0_29] : memref<2x128xi32, #tpu.memory_space<vmem>>, vector<2x128xi32>
      %45 = vector.shape_cast %44 : vector<2x128xi32> to vector<1x2x128xi32>
      %cst_30 = arith.constant dense<0> : vector<1xi32>
      %46 = vector.multi_reduction <add>, %45, %cst_30 [1, 2] : vector<1x2x128xi32> to vector<1xi32>
      %47 = vector.shape_cast %46 : vector<1xi32> to vector<1x1x1xi32>
      %48 = vector.extract %47[0, 0, 0] : i32 from vector<1x1x1xi32>
      %49 = vector.broadcast %48 : i32 to vector<1x1x1x128xi32>
      %c0_31 = arith.constant 0 : index
      %c0_32 = arith.constant 0 : index
      %c0_33 = arith.constant 0 : index
      %c0_34 = arith.constant 0 : index
      %50 = vector.load %arg6[%c0_31, %c0_32, %c0_33, %c0_34] : memref<1x1x1x128xi32, #tpu.memory_space<vmem>>, vector<1x1x1x128xi32>
      tpu.vector_store %arg6[%c0_31, %c0_32, %c0_33, %c0_34], %49 {strides = array<i32>} : memref<1x1x1x128xi32, #tpu.memory_space<vmem>>, vector<1x1x1x128xi32>,
    } else {
    }
    return
  }
  func.func @transform_0(%arg0: i32, %arg1: i32, %arg2: i32) -> (i32, i32, i32, i32) {
    %c1_i32 = arith.constant 1 : i32
    %0 = arith.muli %arg1, %c1_i32 : i32
    %1 = arith.addi %0, %arg2 : i32
    %c0_i32 = arith.constant 0 : i32
    %c0_i32_0 = arith.constant 0 : i32
    %c0_i32_1 = arith.constant 0 : i32
    return %arg0, %c0_i32, %1, %c0_i32_0 : i32, i32, i32, i32
  }
  func.func @transform_1(%arg0: i32, %arg1: i32, %arg2: i32) -> (i32, i32, i32) {
    %c1_i32 = arith.constant 1 : i32
    %0 = arith.muli %arg1, %c1_i32 : i32
    %1 = arith.addi %0, %arg2 : i32
    %c0_i32 = arith.constant 0 : i32
    %c0_i32_0 = arith.constant 0 : i32
    return %arg0, %1, %c0_i32 : i32, i32, i32
  }
  func.func @transform_2(%arg0: i32, %arg1: i32, %arg2: i32) -> (i32, i32, i32, i32) {
    %c0_i32 = arith.constant 0 : i32
    %c0_i32_0 = arith.constant 0 : i32
    %c0_i32_1 = arith.constant 0 : i32
    return %arg0, %arg1, %c0_i32, %c0_i32_0 : i32, i32, i32, i32
  }
  func.func @transform_3(%arg0: i32, %arg1: i32, %arg2: i32) -> (i32, i32, i32, i32) {
    %c0_i32 = arith.constant 0 : i32
    %c0_i32_0 = arith.constant 0 : i32
    %c0_i32_1 = arith.constant 0 : i32
    return %arg0, %arg1, %c0_i32, %c0_i32_0 : i32, i32, i32, i32
  }
}

</mosaic_0001>

<llo_original>
// kernel: tpu_custom_call.1
$region0: #{tpu_custom_call.1}
  #allocation0 [shape = 'u32[]', space=smem, size = 0x4, offset = 0x4, fixed_abs, tag = 'smem constant byte address 0x4 - core index']
  #allocation1 [shape = 'u32[72,128]{1,0:T(1,128)}', space=vmem, size = 0x9000, scoped, tag = 'internal scratch']
  #allocation2 [shape = 'f32[2,128]{1,0:T(2,128)}', space=vmem, size = 0x400, scoped, tag = 'scratch operand']
  #allocation3 [shape = 's32[2,128]{1,0:T(2,128)}', space=vmem, size = 0x400, scoped, tag = 'scratch operand']
  %s0 = inlined_call_operand.hbm [shape: f32[2,4,2,128], index: 0, kind: input, shape index: {}]
  %s1 = inlined_call_operand.hbm [shape: s32[2,2,128], index: 1, kind: input, shape index: {}]
  %s2 = inlined_call_operand.hbm [shape: f32[2,1,1,128], index: 2, kind: output, shape index: {0}]
  %s3 = inlined_call_operand.hbm [shape: s32[2,1,1,128], index: 3, kind: output, shape index: {1}]
  %4 = xla_tuple %s2, %s3
  %s5 = sld [smem:[#allocation0]]
  $region65: #{tpu_custom_call.1} parent=0
    _
  %s7 = ssub.s32 1, %s5
  %s8 = scalar_select 0, %s7, %s5
  $region1: #{tpu_custom_call.1} parent=0
    #allocation4 [shape = 'u8[8192]{0}', space=vmem, size = 0x2000, scoped, tag = 'input window, operand 0']
    #allocation5 [shape = 's32[2]{0}', space=sflag, size = 0x8, scoped, tag = 'scoped memory for tpu_custom_call.1']
    #allocation6 [shape = 's32[2]{0}', space=sflag, size = 0x8, scoped, tag = 'scoped memory for tpu_custom_call.1']
    #allocation7 [shape = 'u8[2048]{0}', space=vmem, size = 0x800, scoped, tag = 'input window, operand 1']
    #allocation8 [shape = 's32[2]{0}', space=sflag, size = 0x8, scoped, tag = 'scoped memory for tpu_custom_call.1']
    #allocation9 [shape = 'u8[1024]{0}', space=vmem, size = 0x400, scoped, tag = 'output window, operand 0']
    #allocation10 [shape = 'u8[1024]{0}', space=vmem, size = 0x400, scoped, tag = 'output window, operand 1']
    #allocation11 [shape = 's32[2]{0}', space=sflag, size = 0x8, scoped, tag = 'scoped memory for tpu_custom_call.1']
    %9 = vsyncpa [#allocation5], 0
    %s10 = scalar_lea.sflag [#allocation5], 1
    %11 = vsyncpa %s10, 0
    %12 = vsyncpa [#allocation8], 0
    %s13 = scalar_lea.sflag [#allocation8], 1
    %14 = vsyncpa %s13, 0
    %15 = vsyncpa [#allocation6], 0
    %s16 = scalar_lea.sflag [#allocation6], 1
    %17 = vsyncpa %s16, 0
    %18 = vsyncpa [#allocation11], 0
    %s19 = scalar_lea.sflag [#allocation11], 1
    %20 = vsyncpa %s19, 0
    loop: start=0, step=1, limit=4
    $region2: #{tpu_custom_call.1} parent=1 // loop_pre_header
      _
    $region3: #{tpu_custom_call.1} parent=1 // loop_header
      %s22 = sphi 0, %s26
      %p23 = scmp.ge.s32.totalorder %s22, 4
      %s29 = sphi 0, %s48
      %s30 = sphi 0, %s44
      %s31 = sphi 0, %s40
      %s32 = sphi 0, %s29
      %s33 = sphi 0, %s30
      %s34 = sphi 0, %s31
      %s35 = sphi 0, %s32
      %s36 = sphi 0, %s33
      %s37 = sphi 0, %s34
      %s55 = sphi 0, %s57
      %s58 = sphi 0, %s55
      %s59 = sphi 0, %s58
      %s75 = sphi 0, %s59
      %s85 = sphi 0, %s87
      %s88 = sphi 0, %s85
      %s89 = sphi 0, %s88
      %s105 = sphi 0, %s89
      %s113 = sphi 0, %s115
      %s116 = sphi 0, %s113
      %s117 = sphi 0, %s116
      %s133 = sphi 0, %s117
      %s141 = sphi 0, %s143
      %s144 = sphi 0, %s141
      %s145 = sphi 0, %s144
      %s161 = sphi 0, %s145
    $region4: #{tpu_custom_call.1} parent=1 // loop_header_branch
      %25 = sbr.rel (%p23) target = $region8
    $region5: #{tpu_custom_call.1} parent=1 // loop_body
      %s27 = ssub.s32 %s22, 1
      %s28 = ssub.s32 %s22, 2
      %s38 = sadd.s32 1, %s31
      %p39 = scmp.ge.s32.totalorder %s38, 1
      %s40 = scalar_select %p39, 0, %s38
      %s41 = sadd.s32 1, %s30
      %s42 = scalar_select %p39, %s41, %s30
      %p43 = scmp.ge.s32.totalorder %s42, 1
      %s44 = scalar_select %p43, 0, %s42
      %s45 = sadd.s32 1, %s29
      %s46 = scalar_select %p43, %s45, %s29
      %p47 = scmp.ge.s32.totalorder %s46, 2
      %s48 = scalar_select %p47, 0, %s46
      %s49 = sadd.s32 %s30, %s31
      %s50 = sadd.s32 %s44, %s40
      %s51 = ssub.s32 %s29, %s48
      %s52 = ssub.s32 %s49, %s50
      %s53 = sor.u32 %s51, %s52
      %p54 = scmp.eq.s32.totalorder %s53, 0
      %s56 = sadd.s32 %s55, 1
      %s57 = scalar_select %p54, %s55, %s56
      %p60 = pneg %p54
      %p61 = scmp.eq.s32.totalorder %s22, 1
      %p62 = por %p60, %p61
      %p63 = scmp.ne.s32.totalorder %s55, %s58
      %p64 = scmp.eq.s32.totalorder %s22, 0
      %p65 = por %p63, %p64
      %p66 = scmp.ne.s32.totalorder %s55, %s58
      %p67 = scmp.eq.s32.totalorder %s27, 1
      %p68 = por %p66, %p67
      %p69 = scmp.ne.s32.totalorder %s58, %s59
      %p70 = scmp.eq.s32.totalorder %s27, 0
      %p71 = por %p69, %p70
      %p72 = scmp.ne.s32.totalorder %s58, %s59
      %p73 = scmp.eq.s32.totalorder %s28, 1
      %p74 = por %p72, %p73
      %p76 = scmp.ne.s32.totalorder %s59, %s75
      %p77 = scmp.eq.s32.totalorder %s28, 0
      %p78 = por %p76, %p77
      %s79 = sadd.s32 %s30, %s31
      %s80 = sadd.s32 %s44, %s40
      %s81 = ssub.s32 %s29, %s48
      %s82 = ssub.s32 %s79, %s80
      %s83 = sor.u32 %s81, %s82
      %p84 = scmp.eq.s32.totalorder %s83, 0
      %s86 = sadd.s32 %s85, 1
      %s87 = scalar_select %p84, %s85, %s86
      %p90 = pneg %p84
      %p91 = scmp.eq.s32.totalorder %s22, 1
      %p92 = por %p90, %p91
      %p93 = scmp.ne.s32.totalorder %s85, %s88
      %p94 = scmp.eq.s32.totalorder %s22, 0
      %p95 = por %p93, %p94
      %p96 = scmp.ne.s32.totalorder %s85, %s88
      %p97 = scmp.eq.s32.totalorder %s27, 1
      %p98 = por %p96, %p97
      %p99 = scmp.ne.s32.totalorder %s88, %s89
      %p100 = scmp.eq.s32.totalorder %s27, 0
      %p101 = por %p99, %p100
      %p102 = scmp.ne.s32.totalorder %s88, %s89
      %p103 = scmp.eq.s32.totalorder %s28, 1
      %p104 = por %p102, %p103
      %p106 = scmp.ne.s32.totalorder %s89, %s105
      %p107 = scmp.eq.s32.totalorder %s28, 0
      %p108 = por %p106, %p107
      %s109 = ssub.s32 %s29, %s48
      %s110 = ssub.s32 %s30, %s44
      %s111 = sor.u32 %s109, %s110
      %p112 = scmp.eq.s32.totalorder %s111, 0
      %s114 = sadd.s32 %s113, 1
      %s115 = scalar_select %p112, %s113, %s114
      %p118 = pneg %p112
      %p119 = scmp.eq.s32.totalorder %s22, 1
      %p120 = por %p118, %p119
      %p121 = scmp.ne.s32.totalorder %s113, %s116
      %p122 = scmp.eq.s32.totalorder %s22, 0
      %p123 = por %p121, %p122
      %p124 = scmp.ne.s32.totalorder %s113, %s116
      %p125 = scmp.eq.s32.totalorder %s27, 1
      %p126 = por %p124, %p125
      %p127 = scmp.ne.s32.totalorder %s116, %s117
      %p128 = scmp.eq.s32.totalorder %s27, 0
      %p129 = por %p127, %p128
      %p130 = scmp.ne.s32.totalorder %s116, %s117
      %p131 = scmp.eq.s32.totalorder %s28, 1
      %p132 = por %p130, %p131
      %p134 = scmp.ne.s32.totalorder %s117, %s133
      %p135 = scmp.eq.s32.totalorder %s28, 0
      %p136 = por %p134, %p135
      %s137 = ssub.s32 %s29, %s48
      %s138 = ssub.s32 %s30, %s44
      %s139 = sor.u32 %s137, %s138
      %p140 = scmp.eq.s32.totalorder %s139, 0
      %s142 = sadd.s32 %s141, 1
      %s143 = scalar_select %p140, %s141, %s142
      %p146 = pneg %p140
      %p147 = scmp.eq.s32.totalorder %s22, 1
      %p148 = por %p146, %p147
      %p149 = scmp.ne.s32.totalorder %s141, %s144
      %p150 = scmp.eq.s32.totalorder %s22, 0
      %p151 = por %p149, %p150
      %p152 = scmp.ne.s32.totalorder %s141, %s144
      %p153 = scmp.eq.s32.totalorder %s27, 1
      %p154 = por %p152, %p153
      %p155 = scmp.ne.s32.totalorder %s144, %s145
      %p156 = scmp.eq.s32.totalorder %s27, 0
      %p157 = por %p155, %p156
      %p158 = scmp.ne.s32.totalorder %s144, %s145
      %p159 = scmp.eq.s32.totalorder %s28, 1
      %p160 = por %p158, %p159
      %p162 = scmp.ne.s32.totalorder %s145, %s161
      %p163 = scmp.eq.s32.totalorder %s28, 0
      %p164 = por %p162, %p163
      %p165 = scmp.le.s32.totalorder 1, %s22
      %p166 = scmp.lt.s32.totalorder %s22, 3
      %p167 = pnand %p165, %p166
      %p168 = pneg %p167
      // Predicated region
      $region9: #{tpu_custom_call.1} parent=5 // pred_check
        _
      $region10: #{tpu_custom_call.1} parent=5 // pred_check_branch
        %170 = sbr.rel (%p167) target = $region12
      $region11: #{tpu_custom_call.1} parent=5 // pred_region
        %s171 = ssub.s32 %s22, 1
      $region12: #{tpu_custom_call.1} parent=5 // pred_fallthru
        _
      %p172 = scmp.lt.s32.totalorder %s22, 2
      // Predicated region
      $region13: #{tpu_custom_call.1} parent=5 // pred_check
        %p173 = pneg %p172
      $region14: #{tpu_custom_call.1} parent=5 // pred_check_branch
        %175 = sbr.rel (%p173) target = $region16
      $region15: #{tpu_custom_call.1} parent=5 // pred_region
        // Predicated region
        $region17: #{tpu_custom_call.1} parent=15 // pred_check
          %p176 = pneg %p65
        $region18: #{tpu_custom_call.1} parent=15 // pred_check_branch
          %178 = sbr.rel (%p176) target = $region20
        $region19: #{tpu_custom_call.1} parent=15 // pred_region
          %s179 = sand.u32 %s55, 1
          %s180 = scalar_lea.sflag [#allocation5], %s179
          %s181 = sand.u32 %s55, 1
          %s182 = smul.addr %s181, 8
          %s183 = scalar_lea.vmem [#allocation4], %s182
          %s184 = sadd.s32 %s30, %s31
          %186 = vsyncadd %s180, 0
          %s187 = smul.addr %s29, 4
          %s188 = sadd.s32 %s184, %s187
          %s189 = smul.addr %s188, 2
          %s190 = scalar_lea.hbm %s0, %s189
          %s191 = sshll.u32 %s190, 4
          %s192 = int_to_ptr.hbm [resolvable:$true] %s191
          %s193 = sshll.u32 %s183, 4
          %s194 = int_to_ptr.vmem [resolvable:$true] %s193
          %199 = dma.hbm_to_vmem [thread:$0]  %s192, 128, %s194, %s180, 32, 32, 2
        $region20: #{tpu_custom_call.1} parent=15 // pred_fallthru
          _
        // Predicated region
        $region21: #{tpu_custom_call.1} parent=15 // pred_check
          %p200 = pneg %p95
        $region22: #{tpu_custom_call.1} parent=15 // pred_check_branch
          %202 = sbr.rel (%p200) target = $region24
        $region23: #{tpu_custom_call.1} parent=15 // pred_region
          %s203 = sand.u32 %s85, 1
          %s204 = scalar_lea.sflag [#allocation8], %s203
          %s205 = sand.u32 %s85, 1
          %s206 = smul.addr %s205, 2
          %s207 = scalar_lea.vmem [#allocation7], %s206
          %s208 = sadd.s32 %s30, %s31
          %210 = vsyncadd %s204, 0
          %s211 = sadd.s32 %s208, %s29
          %s212 = smul.addr %s211, 2
          %s213 = scalar_lea.hbm %s1, %s212
          %s215 = sshll.u32 %s213, 4
          %s216 = int_to_ptr.hbm [resolvable:$true] %s215
          %s217 = sshll.u32 %s207, 4
          %s218 = int_to_ptr.vmem [resolvable:$true] %s217
          %220 = dma.hbm_to_vmem [thread:$0]  %s216, 32, %s218, %s204
        $region24: #{tpu_custom_call.1} parent=15 // pred_fallthru
          _
      $region16: #{tpu_custom_call.1} parent=5 // pred_fallthru
        _
      %p221 = scmp.le.s32.totalorder 1, %s22
      %p222 = scmp.lt.s32.totalorder %s22, 3
      %p223 = pnand %p221, %p222
      %p224 = pneg %p223
      // Predicated region
      $region25: #{tpu_custom_call.1} parent=5 // pred_check
        _
      $region26: #{tpu_custom_call.1} parent=5 // pred_check_branch
        %226 = sbr.rel (%p223) target = $region28
      $region27: #{tpu_custom_call.1} parent=5 // pred_region
        %s227 = ssub.s32 %s22, 1
        %s228 = sand.u32 %s58, 1
        %s229 = scalar_lea.sflag [#allocation5], %s228
        %s230 = sand.u32 %s58, 1
        %s231 = smul.addr %s230, 8
        %s232 = scalar_lea.vmem [#allocation4], %s231
        // Predicated region
        $region29: #{tpu_custom_call.1} parent=27 // pred_check
          %p233 = pneg %p71
        $region30: #{tpu_custom_call.1} parent=27 // pred_check_branch
          %235 = sbr.rel (%p233) target = $region32
        $region31: #{tpu_custom_call.1} parent=27 // pred_region
          %237 = dma.done %s229, 128
        $region32: #{tpu_custom_call.1} parent=27 // pred_fallthru
          _
        %s238 = sand.u32 %s88, 1
        %s239 = scalar_lea.sflag [#allocation8], %s238
        %s240 = sand.u32 %s88, 1
        %s241 = smul.addr %s240, 2
        %s242 = scalar_lea.vmem [#allocation7], %s241
        // Predicated region
        $region33: #{tpu_custom_call.1} parent=27 // pred_check
          %p243 = pneg %p101
        $region34: #{tpu_custom_call.1} parent=27 // pred_check_branch
          %245 = sbr.rel (%p243) target = $region36
        $region35: #{tpu_custom_call.1} parent=27 // pred_region
          %247 = dma.done %s239, 32
        $region36: #{tpu_custom_call.1} parent=27 // pred_fallthru
          _
        %s248 = sand.u32 %s58, 1
        %s249 = scalar_lea.sflag [#allocation5], %s248
        %s250 = sand.u32 %s58, 1
        %s251 = smul.addr %s250, 8
        %s252 = scalar_lea.vmem [#allocation4], %s251
        %p253 = pneg %p71
        %p254 = pneg %p68
        %s255 = sand.u32 %s88, 1
        %s256 = scalar_lea.sflag [#allocation8], %s255
        %s257 = sand.u32 %s88, 1
        %s258 = smul.addr %s257, 2
        %s259 = scalar_lea.vmem [#allocation7], %s258
        %p260 = pneg %p101
        %p261 = pneg %p98
        %p262 = pneg %p129
        %p263 = pneg %p126
        %s264 = sand.u32 %s116, 1
        %s265 = scalar_lea.sflag [#allocation6], %s264
        %s266 = sand.u32 %s116, 1
        %s267 = scalar_lea.vmem [#allocation9], %s266
        %p268 = pneg %p157
        %p269 = pneg %p154
        %s270 = sand.u32 %s144, 1
        %s271 = scalar_lea.sflag [#allocation11], %s270
        %s272 = sand.u32 %s144, 1
        %s273 = scalar_lea.vmem [#allocation10], %s272
        %s274 = sadd.s32 %s33, %s34
        %s275 = sadd.s32 %s33, %s34
        %p276 = scmp.eq.s32.totalorder %s34, 0
        // Predicated region
        $region37: #{tpu_custom_call.1} parent=27 // pred_check
          %p277 = pneg %p276
        $region38: #{tpu_custom_call.1} parent=27 // pred_check_branch
          %279 = sbr.rel (%p277) target = $region40
        $region39: #{tpu_custom_call.1} parent=27 // pred_region
          %280 = vst [vmem:[#allocation2] sm:$0x3] 0.0
          %281 = vst [vmem:[#allocation3] sm:$0x3] 0
        $region40: #{tpu_custom_call.1} parent=27 // pred_fallthru
          _
        %v282 = vld [vmem:[%s232] sm:$0x3]
        %v283 = vld [vmem:[%s232 + $0x2] sm:$0x3]
        %v284 = vld [vmem:[%s232 + $0x4] sm:$0x3]
        %v285 = vld [vmem:[%s232 + $0x6] sm:$0x3]
        %v286 = vld [vmem:[%s242] sm:$0x3]
        %vm287 = vcmask 1041408
        %v288 = vsel %vm287, %v282, -inf
        %v289 = vsel %vm287, %v283, -inf
        %v290 = vsel %vm287, %v284, -inf
        %v291 = vsel %vm287, %v285, -inf
        %v292 = vmax.f32 %v288, %v289
        %v293 = vmax.f32 %v290, %v291
        %v294 = vmax.f32 %v292, %v293
        %v295 = vsub.f32 %v282, %v294
        %v296 = vsub.f32 %v283, %v294
        %v297 = vsub.f32 %v284, %v294
        %v298 = vsub.f32 %v285, %v294
        %v299 = vmul.f32 %v295, 1.442695
        %v300 = vpow.pop %v299
        %v301 = vmul.f32 %v296, 1.442695
        %v302 = vpow.pop %v301
        %v303 = vmul.f32 %v297, 1.442695
        %v304 = vpow.pop %v303
        %v305 = vmul.f32 %v298, 1.442695
        %v306 = vpow.pop %v305
        %v307 = vsel %vm287, %v300, 0.0
        %v308 = vsel %vm287, %v302, 0.0
        %v309 = vadd.f32 %v307, %v308
        %v310 = vsel %vm287, %v304, 0.0
        %v311 = vadd.f32 %v309, %v310
        %v312 = vsel %vm287, %v306, 0.0
        %v313 = vadd.f32 %v311, %v312
        %v314 = vlog2.pop %v313
        %v315 = vmul.f32 %v314, 0.6931472
        %v316 = vadd.f32 %v294, %v315
        %vm317 = vcmp.eq.s32.totalorder %v286, 0
        %vm318 = vcmp.eq.s32.totalorder %v286, 1
        %vm319 = vcmp.eq.s32.totalorder %v286, 2
        %vm320 = vcmp.eq.s32.totalorder %v286, 3
        %v321 = vsel %vm317, %v282, 0.0
        %v322 = vsel %vm318, %v283, 0.0
        %v323 = vsel %vm319, %v284, 0.0
        %v324 = vsel %vm320, %v285, 0.0
        %v325 = vsel %vm287, %v321, 0.0
        %v326 = vsel %vm287, %v322, 0.0
        %v327 = vadd.f32 %v325, %v326
        %v328 = vsel %vm287, %v323, 0.0
        %v329 = vadd.f32 %v327, %v328
        %v330 = vsel %vm287, %v324, 0.0
        %v331 = vadd.f32 %v329, %v330
        %vm332 = vcmp.ne.s32.totalorder %v286, 4294967295
        %v333 = vld [vmem:[#allocation2] sm:$0x3]
        %v334 = vsub.f32 %v316, %v331
        %v335 = vsel %vm332, %v334, 0.0
        %v336 = vadd.f32 %v333, %v335
        %337 = vst [vmem:[#allocation2] sm:$0x3] %v336
        %v338 = vld [vmem:[#allocation3] sm:$0x3]
        %v339 = vsel %vm332, 1, 0
        %v340 = vadd.s32 %v338, %v339
        %341 = vst [vmem:[#allocation3] sm:$0x3] %v340
        // Predicated region
        $region41: #{tpu_custom_call.1} parent=27 // pred_check
          %p342 = pneg %p276
        $region42: #{tpu_custom_call.1} parent=27 // pred_check_branch
          %344 = sbr.rel (%p342) target = $region44
        $region43: #{tpu_custom_call.1} parent=27 // pred_region
          %v345 = vld [vmem:[#allocation2] sm:$0x3]
          %v346 = vsel %vm287, %v345, 0.0
          %347 = vadd.xlane.f32.xlu0 %v346
          %v348 = vpop.xlane.xlu0 %347
          %v349 = vrot.slane %v348, 4
          %v350 = vadd.f32 %v348, %v349
          %v351 = vrot.slane %v350, 2
          %v352 = vadd.f32 %v350, %v351
          %v353 = vrot.slane %v352, 1
          %v354 = vadd.f32 %v352, %v353
          %s355 = vtos %v354
          %v356 = vstv %s355
          %357 = vst [vmem:[%s267] sm:$0x1] %v356
          %v358 = vld [vmem:[#allocation3] sm:$0x3]
          %v359 = vsel %vm287, %v358, 0
          %v360 = vand.u32 %v359, 65535
          %v361 = vshrl.u32 %v359, 16
          %v362 = vcvt.s32.f32 %v360
          %v363 = vcvt.s32.f32 %v361
          %364 = vadd.xlane.f32.xlu0 %v362
          %v365 = vpop.xlane.xlu0 %364
          %366 = vadd.xlane.f32.xlu0 %v363
          %v367 = vpop.xlane.xlu0 %366
          %v368 = vcvt.f32.s32 %v365
          %v369 = vcvt.f32.s32 %v367
          %v370 = vshll.u32 %v369, 16
          %v371 = vadd.s32 %v370, %v368
          %v372 = vrot.slane %v371, 4
          %v373 = vadd.s32 %v371, %v372
          %v374 = vrot.slane %v373, 2
          %v375 = vadd.s32 %v373, %v374
          %v376 = vrot.slane %v375, 1
          %v377 = vadd.s32 %v375, %v376
          %s378 = vtos %v377
          %v379 = vstv %s378
          %380 = vst [vmem:[%s273] sm:$0x1] %v379
        $region44: #{tpu_custom_call.1} parent=27 // pred_fallthru
          _
        %s381 = sand.u32 %s116, 1
        %s382 = scalar_lea.sflag [#allocation6], %s381
        %s383 = sand.u32 %s116, 1
        %s384 = scalar_lea.vmem [#allocation9], %s383
        %s385 = sand.u32 %s144, 1
        %s386 = scalar_lea.sflag [#allocation11], %s385
        %s387 = sand.u32 %s144, 1
        %s388 = scalar_lea.vmem [#allocation10], %s387
        // Predicated region
        $region45: #{tpu_custom_call.1} parent=27 // pred_check
          %p389 = pneg %p126
        $region46: #{tpu_custom_call.1} parent=27 // pred_check_branch
          %391 = sbr.rel (%p389) target = $region48
        $region47: #{tpu_custom_call.1} parent=27 // pred_region
          %393 = vsyncadd %s382, 0
          %s394 = sadd.s32 %s33, %s32
          %s395 = scalar_lea.hbm %s2, %s394
          %s397 = sshll.u32 %s384, 4
          %s398 = int_to_ptr.vmem [resolvable:$true] %s397
          %s399 = sshll.u32 %s395, 4
          %s400 = int_to_ptr.hbm [resolvable:$true] %s399
          %402 = dma.vmem_to_hbm [thread:$0]  %s398, 16, %s400, %s382
        $region48: #{tpu_custom_call.1} parent=27 // pred_fallthru
          _
        // Predicated region
        $region49: #{tpu_custom_call.1} parent=27 // pred_check
          %p403 = pneg %p154
        $region50: #{tpu_custom_call.1} parent=27 // pred_check_branch
          %405 = sbr.rel (%p403) target = $region52
        $region51: #{tpu_custom_call.1} parent=27 // pred_region
          %407 = vsyncadd %s386, 0
          %s408 = sadd.s32 %s33, %s32
          %s409 = scalar_lea.hbm %s3, %s408
          %s411 = sshll.u32 %s388, 4
          %s412 = int_to_ptr.vmem [resolvable:$true] %s411
          %s413 = sshll.u32 %s409, 4
          %s414 = int_to_ptr.hbm [resolvable:$true] %s413
          %416 = dma.vmem_to_hbm [thread:$0]  %s412, 16, %s414, %s386
        $region52: #{tpu_custom_call.1} parent=27 // pred_fallthru
          _
      $region28: #{tpu_custom_call.1} parent=5 // pred_fallthru
        _
      %p417 = scmp.le.s32.totalorder 2, %s22
      // Predicated region
      $region53: #{tpu_custom_call.1} parent=5 // pred_check
        %p418 = pneg %p417
      $region54: #{tpu_custom_call.1} parent=5 // pred_check_branch
        %420 = sbr.rel (%p418) target = $region56
      $region55: #{tpu_custom_call.1} parent=5 // pred_region
        %s421 = ssub.s32 %s22, 2
        // Predicated region
        $region57: #{tpu_custom_call.1} parent=55 // pred_check
          %p422 = pneg %p132
        $region58: #{tpu_custom_call.1} parent=55 // pred_check_branch
          %424 = sbr.rel (%p422) target = $region60
        $region59: #{tpu_custom_call.1} parent=55 // pred_region
          %s425 = sand.u32 %s117, 1
          %s426 = scalar_lea.sflag [#allocation6], %s425
          %s427 = sand.u32 %s117, 1
          %s428 = scalar_lea.vmem [#allocation9], %s427
          %430 = dma.done %s426, 16
        $region60: #{tpu_custom_call.1} parent=55 // pred_fallthru
          _
        // Predicated region
        $region61: #{tpu_custom_call.1} parent=55 // pred_check
          %p431 = pneg %p160
        $region62: #{tpu_custom_call.1} parent=55 // pred_check_branch
          %433 = sbr.rel (%p431) target = $region64
        $region63: #{tpu_custom_call.1} parent=55 // pred_region
          %s434 = sand.u32 %s145, 1
          %s435 = scalar_lea.sflag [#allocation11], %s434
          %s436 = sand.u32 %s145, 1
          %s437 = scalar_lea.vmem [#allocation10], %s436
          %439 = dma.done %s435, 16
        $region64: #{tpu_custom_call.1} parent=55 // pred_fallthru
          _
      $region56: #{tpu_custom_call.1} parent=5 // pred_fallthru
        _
    $region6: #{tpu_custom_call.1} parent=1 // loop_footer
      %s26 = sadd.s32 1, %s22
    $region7: #{tpu_custom_call.1} parent=1 // loop_footer_branch
      %21 = sbr.rel target = $region3
    $region8: #{tpu_custom_call.1} parent=1 // loop_exit
      _
    %440 = vsyncpa [#allocation5], 1
    %s441 = scalar_lea.sflag [#allocation5], 1
    %442 = vsyncpa %s441, 1
    %443 = vsyncpa [#allocation8], 1
    %s444 = scalar_lea.sflag [#allocation8], 1
    %445 = vsyncpa %s444, 1
    %446 = vsyncpa [#allocation6], 1
    %s447 = scalar_lea.sflag [#allocation6], 1
    %448 = vsyncpa %s447, 1
    %449 = vsyncpa [#allocation11], 1
    %s450 = scalar_lea.sflag [#allocation11], 1
    %451 = vsyncpa %s450, 1

</llo_original>
